<compile_context>
chip_gen: v6e
topology: v6e:2x2x1
jax: 0.10.0
libtpu: 0.0.40
codegen_flags: <defaults>
</compile_context>

<pallas_src>
import functools

import jax
import jax.numpy as jnp
from jax import lax
from jax.experimental import pallas as pl
from jax.experimental.pallas import tpu as pltpu


def _round_up(n, m):
    return (n + m - 1) // m * m


def deepfm_kernel(shift_ref, x_ref, wlin_ref, rep_ref, vcol_ref, rhs_ref,
                  b1_ref, w2_ref, b2_ref, out_ref, *, vocab, emb_dim, fm_cols):
    x = x_ref[...]                                            # (TB, D) f32

    # ---- first-order linear term on the VPU (D-lane row reduce) ----
    linear_part = jnp.sum(x * wlin_ref[...], axis=-1, keepdims=True)   # (TB, 1)

    # ---- 2D one-hot: lane-replicate indices via a tiny MXU matmul, then a
    #      single compare against the per-column target value (col % V) ----
    shift = shift_ref[0]                                      # f32 scalar (SMEM)
    x_rep = jnp.dot(x, rep_ref[...],
                    preferred_element_type=jnp.float32)       # (TB, D*V), exact
    # trunc == floor since x + shift >= 1; clamp to [0, V-1] (gather semantics).
    q = jnp.clip(jnp.floor(x_rep + shift), 0.0, float(vocab - 1))
    onehot = jnp.where(q == vcol_ref[...], 1.0, 0.0)          # (TB, D*V) f32

    # ---- single fused K=D*V matmul: [emb | rowsum(emb^2) | 0 | folded W1] ----
    fused = jnp.dot(onehot.astype(jnp.bfloat16), rhs_ref[...],
                    preferred_element_type=jnp.float32)       # (TB, fm_cols+H0P)
    fm_blk = fused[:, :fm_cols]                               # 128-aligned slice
    h_blk = fused[:, fm_cols:]                                # 128-aligned slice

    # FM second order: 0.5 * (sum_e s_e^2 - sum_{d,e} emb[idx_d, e]^2).
    c = lax.broadcasted_iota(jnp.int32, (1, fm_cols), 1)
    sq_mask = (c < emb_dim).astype(jnp.float32)               # 1 on the s_e columns
    lin_mask = (c == emb_dim).astype(jnp.float32)             # 1 on the ssq column
    fm_part = 0.5 * jnp.sum(fm_blk * (fm_blk * sq_mask - lin_mask),
                            axis=-1, keepdims=True)           # (TB, 1)

    # ---- DNN; dropout = identity (eval mode) ----
    h = jnp.maximum(h_blk + b1_ref[...], 0.0)                 # (TB, H0P) f32
    dnn_part = jnp.dot(h.astype(jnp.bfloat16), w2_ref[...],
                       preferred_element_type=jnp.float32) + b2_ref[...]  # (TB, H1)

    out_ref[...] = jax.nn.sigmoid(linear_part + fm_part + dnn_part)


def prepare_params(params, input_dim, embedding_dim, hidden_dims):
    """One-time weight preprocessing (folding / fusing / lane padding)."""
    w_lin, b_lin, emb, w1, b1, w2, b2 = params
    D = V = input_dim                 # the module ties #fields == vocab == input_dim
    E = embedding_dim
    H0, H1 = hidden_dims
    H0P = _round_up(H0, 128)
    FM_COLS = 128
    assert E + 1 <= FM_COLS, "embedding_dim must be < 128 for the fused layout"

    emb = emb.astype(jnp.float32)
    wlin_row = w_lin.reshape(1, D).astype(jnp.float32)

    # 0/1 replication matrix: column d*V + v picks field d  ->  x_rep[:, c] = x[:, c//V].
    rep_mat = jnp.repeat(jnp.eye(D, dtype=jnp.float32), V, axis=1)       # (D, D*V)
    # Per-column target value: column d*V + v must match shifted index v.
    vcol = jnp.tile(jnp.arange(V, dtype=jnp.float32), (D,)).reshape(1, D * V)

    # Fused RHS (D*V, FM_COLS + H0P), bf16.
    emb_rep = jnp.tile(emb, (D, 1))                                      # (D*V, E)
    ssq_rep = jnp.tile(jnp.sum(emb * emb, axis=1, keepdims=True), (D, 1))
    left = jnp.concatenate(
        [emb_rep, ssq_rep, jnp.zeros((D * V, FM_COLS - E - 1), jnp.float32)],
        axis=1)                                                          # (D*V, 128)
    # (onehot @ emb_gather) @ W1  ==  onehot @ (emb folded into W1 per field).
    w1_fold = jnp.einsum('ve,deh->dvh', emb,
                         w1.reshape(D, E, H0)).reshape(D * V, H0)
    w1_fold = jnp.pad(w1_fold, ((0, 0), (0, H0P - H0)))
    rhs_fused = jnp.concatenate([left, w1_fold], axis=1).astype(jnp.bfloat16)

    b1_p = jnp.pad(b1.reshape(1, H0), ((0, 0), (0, H0P - H0))).astype(jnp.float32)
    w2_p = jnp.pad(w2, ((0, H0P - H0), (0, 0))).astype(jnp.bfloat16)     # (H0P, H1)
    # Fold the linear bias into the second-layer bias (exact in f32).
    b2_p = (b2.reshape(1, H1) + b_lin.reshape(1, 1)).astype(jnp.float32)

    return dict(wlin_row=wlin_row, rep_mat=rep_mat, vcol=vcol,
                rhs_fused=rhs_fused, b1=b1_p, w2=w2_p, b2=b2_p,
                vocab=V, emb_dim=E, fm_cols=FM_COLS, h1=H1)


def deepfm_forward(x, prepared, *, tile_b=512):
    """x: any shape with leading batch dim; must flatten to (B, input_dim)."""
    B = x.shape[0]
    x2d = x.reshape(B, -1).astype(jnp.float32)
    D = x2d.shape[1]
    assert D == prepared['rep_mat'].shape[0], (
        "x must flatten to exactly input_dim columns")

    # Global shift over the FULL (unpadded) batch — must not be computed per tile.
    shift = (jnp.abs(jnp.min(x2d)) + 1.0).reshape(1).astype(jnp.float32)

    TB = min(tile_b, _round_up(B, 8))
    Bp = _round_up(B, TB)
    if Bp != B:
        x2d = jnp.pad(x2d, ((0, Bp - B), (0, 0)))
    # NOTE(v7x): for large B prefer Bp // TB even, so both TensorCores stay busy.

    wlin_row = prepared['wlin_row']
    rep_mat = prepared['rep_mat']
    vcol = prepared['vcol']
    rhs = prepared['rhs_fused']
    b1 = prepared['b1']
    w2 = prepared['w2']
    b2 = prepared['b2']
    H1 = prepared['h1']
    DV = rep_mat.shape[1]
    NF = rhs.shape[1]
    H0P = w2.shape[0]

    kernel = functools.partial(
        deepfm_kernel, vocab=prepared['vocab'], emb_dim=prepared['emb_dim'],
        fm_cols=prepared['fm_cols'])

    cost = pl.CostEstimate(
        flops=2 * Bp * (D * DV + DV * NF + H0P * H1),
        transcendentals=Bp * H1,
        bytes_accessed=int(x2d.size * 4 + Bp * H1 * 4 + rep_mat.size * 4
                           + vcol.size * 4 + rhs.size * 2 + b1.size * 4
                           + w2.size * 2 + b2.size * 4 + wlin_row.size * 4))

    out = pl.pallas_call(
        kernel,
        out_shape=jax.ShapeDtypeStruct((Bp, H1), jnp.float32),
        grid=(Bp // TB,),
        in_specs=[
            pl.BlockSpec(memory_space=pltpu.MemorySpace.SMEM),   # shift scalar
            pl.BlockSpec((TB, D), lambda i: (i, 0)),             # x tile
            pl.BlockSpec(wlin_row.shape, lambda i: (0, 0)),      # linear weight row
            pl.BlockSpec(rep_mat.shape, lambda i: (0, 0)),       # lane replication mat
            pl.BlockSpec(vcol.shape, lambda i: (0, 0)),          # per-column targets
            pl.BlockSpec(rhs.shape, lambda i: (0, 0)),           # fused [emb|ssq|W1fold]
            pl.BlockSpec(b1.shape, lambda i: (0, 0)),
            pl.BlockSpec(w2.shape, lambda i: (0, 0)),
            pl.BlockSpec(b2.shape, lambda i: (0, 0)),
        ],
        out_specs=pl.BlockSpec((TB, H1), lambda i: (i, 0)),
        compiler_params=pltpu.CompilerParams(
            dimension_semantics=("parallel",),
            vmem_limit_bytes=48 * 1024 * 1024),
        cost_estimate=cost,
    )(shift, x2d, wlin_row, rep_mat, vcol, rhs, b1, w2, b2)

    return out[:B]


def init_params(key, input_dim, embedding_dim, hidden_dims):
    k = jax.random.split(key, 7)
    w_lin = jax.random.normal(k[0], (input_dim, 1), jnp.float32) * 0.1
    b_lin = jax.random.normal(k[1], (1, 1), jnp.float32) * 0.1
    emb = jax.random.normal(k[2], (input_dim, embedding_dim), jnp.float32) * 0.1
    w1 = jax.random.normal(k[3], (input_dim * embedding_dim, hidden_dims[0]),
                           jnp.float32) * 0.1
    b1 = jax.random.normal(k[4], (1, hidden_dims[0]), jnp.float32) * 0.1
    w2 = jax.random.normal(k[5], (hidden_dims[0], hidden_dims[1]),
                           jnp.float32) * 0.1
    b2 = jax.random.normal(k[6], (1, hidden_dims[1]), jnp.float32) * 0.1
    return (w_lin, b_lin, emb, w1, b1, w2, b2)


def deepfm_reference(x, params):
    """Pure-JAX f32 reference with the module's semantics (sanity check)."""
    w_lin, b_lin, emb, w1, b1, w2, b2 = params
    B = x.shape[0]
    x = x.reshape(B, -1).astype(jnp.float32)
    linear_part = x @ w_lin + b_lin
    mn = jnp.min(x)
    idx = (x + jnp.abs(mn) + 1.0).astype(jnp.int32)
    fm_emb = emb[idx]                                  # (B, D, E)
    square_of_sum = jnp.sum(fm_emb, axis=1) ** 2
    sum_of_square = jnp.sum(fm_emb ** 2, axis=1)
    fm_part = 0.5 * jnp.sum(square_of_sum - sum_of_square, axis=1, keepdims=True)
    dnn_input = fm_emb.reshape(B, -1)
    h = jnp.maximum(dnn_input @ w1 + b1, 0.0)
    dnn_part = h @ w2 + b2
    return jax.nn.sigmoid(linear_part + fm_part + dnn_part)


if __name__ == "__main__":
    # Small, module-consistent shapes (x flattens to width == input_dim).
    B, input_dim, embedding_dim = 8, 16, 8
    hidden_dims = (32, 4)
    # dropout = 0.5 -> identity in eval mode.

    key = jax.random.PRNGKey(0)
    k_x, k_p = jax.random.split(key)

    # Integer-valued float input so that `.long()` indexing is well defined.
    # Values in [-3, 11]; force the global min to be -3 so shifted indices
    # (x + |min| + 1) land in [1, 15] ⊂ [0, input_dim).
    x = jax.random.randint(k_x, (B, 4, 4), minval=-3, maxval=12).astype(jnp.float32)
    x = x.at[0, 0, 0].set(-3.0)

    params = init_params(k_p, input_dim, embedding_dim, hidden_dims)
    prepared = prepare_params(params, input_dim, embedding_dim, hidden_dims)

    out = jax.block_until_ready(deepfm_forward(x, prepared))
    ref = jax.block_until_ready(deepfm_reference(x, params))

    assert out.shape == (B, hidden_dims[1])
    # bf16 MXU operands with f32 accumulation -> relaxed tolerance vs f32 ref.
    assert jnp.allclose(out, ref, atol=2e-2, rtol=2e-2), (out, ref)

    print("KERNEL_OK")
</pallas_src>

<mosaic_0001>
module attributes {stable_mosaic.version = 11 : i64} {
  func.func @deepfm_kernel(%arg0: i32, %arg1: memref<1xf32, #tpu.memory_space<smem>>, %arg2: memref<8x16xf32, #tpu.memory_space<vmem>>, %arg3: memref<1x16xf32, #tpu.memory_space<vmem>>, %arg4: memref<16x256xf32, #tpu.memory_space<vmem>>, %arg5: memref<1x256xf32, #tpu.memory_space<vmem>>, %arg6: memref<256x256xbf16, #tpu.memory_space<vmem>>, %arg7: memref<1x128xf32, #tpu.memory_space<vmem>>, %arg8: memref<128x4xbf16, #tpu.memory_space<vmem>>, %arg9: memref<1x4xf32, #tpu.memory_space<vmem>>, %arg10: memref<8x4xf32, #tpu.memory_space<vmem>>) attributes {dimension_semantics = [#tpu.dimension_semantics<parallel>], iteration_bounds = array<i64: 1>, scalar_prefetch = 0 : i64, scratch_operands = 0 : i64, tpu.core_type = #tpu.core_type<tc>, window_params = [{transform_indices = @transform_0, window_bounds = array<i64: 1>}, {transform_indices = @transform_1, window_bounds = array<i64: 8, 16>}, {pipeline_mode = #tpu.pipeline_mode<synchronous>, transform_indices = @transform_2, window_bounds = array<i64: 1, 16>}, {pipeline_mode = #tpu.pipeline_mode<synchronous>, transform_indices = @transform_3, window_bounds = array<i64: 16, 256>}, {pipeline_mode = #tpu.pipeline_mode<synchronous>, transform_indices = @transform_4, window_bounds = array<i64: 1, 256>}, {pipeline_mode = #tpu.pipeline_mode<synchronous>, transform_indices = @transform_5, window_bounds = array<i64: 256, 256>}, {pipeline_mode = #tpu.pipeline_mode<synchronous>, transform_indices = @transform_6, window_bounds = array<i64: 1, 128>}, {pipeline_mode = #tpu.pipeline_mode<synchronous>, transform_indices = @transform_7, window_bounds = array<i64: 128, 4>}, {pipeline_mode = #tpu.pipeline_mode<synchronous>, transform_indices = @transform_8, window_bounds = array<i64: 1, 4>}, {transform_indices = @transform_9, window_bounds = array<i64: 8, 4>}]} {
    %c0 = arith.constant 0 : index
    %c0_0 = arith.constant 0 : index
    %0 = vector.load %arg2[%c0, %c0_0] : memref<8x16xf32, #tpu.memory_space<vmem>>, vector<8x16xf32>
    %c0_1 = arith.constant 0 : index
    %c0_2 = arith.constant 0 : index
    %1 = vector.load %arg3[%c0_1, %c0_2] : memref<1x16xf32, #tpu.memory_space<vmem>>, vector<1x16xf32>
    %2 = vector.broadcast %1 : vector<1x16xf32> to vector<8x16xf32>
    %3 = arith.mulf %0, %2 : vector<8x16xf32>
    %cst = arith.constant dense<0.000000e+00> : vector<8xf32>
    %4 = vector.multi_reduction <add>, %3, %cst [1] : vector<8x16xf32> to vector<8xf32>
    %5 = vector.shape_cast %4 : vector<8xf32> to vector<8x1xf32>
    %c0_3 = arith.constant 0 : index
    %6 = memref.load %arg1[%c0_3] : memref<1xf32, #tpu.memory_space<smem>>
    %c0_4 = arith.constant 0 : index
    %c0_5 = arith.constant 0 : index
    %7 = vector.load %arg4[%c0_4, %c0_5] : memref<16x256xf32, #tpu.memory_space<vmem>>, vector<16x256xf32>
    %cst_6 = arith.constant dense<0.000000e+00> : vector<8x256xf32>
    %8 = tpu.matmul %0, %7, %cst_6 {dimension_numbers = #tpu.dot_dimension_numbers<[1], [0], [0], [1], [0, 0, 1, 1], [], []>} : vector<8x16xf32>, vector<16x256xf32>, vector<8x256xf32> -> vector<8x256xf32>
    %9 = vector.broadcast %6 : f32 to vector<8x256xf32>
    %10 = arith.addf %8, %9 : vector<8x256xf32>
    %11 = math.floor %10 : vector<8x256xf32>
    %cst_7 = arith.constant 0.000000e+00 : f32
    %cst_8 = arith.constant 1.500000e+01 : f32
    %12 = vector.broadcast %cst_7 : f32 to vector<8x256xf32>
    %13 = arith.maximumf %12, %11 : vector<8x256xf32>
    %14 = vector.broadcast %cst_8 : f32 to vector<8x256xf32>
    %15 = arith.minimumf %14, %13 : vector<8x256xf32>
    %c0_9 = arith.constant 0 : index
    %c0_10 = arith.constant 0 : index
    %16 = vector.load %arg5[%c0_9, %c0_10] : memref<1x256xf32, #tpu.memory_space<vmem>>, vector<1x256xf32>
    %17 = vector.broadcast %16 : vector<1x256xf32> to vector<8x256xf32>
    %18 = arith.cmpf oeq, %15, %17 : vector<8x256xf32>
    %cst_11 = arith.constant 1.000000e+00 : f32
    %cst_12 = arith.constant 0.000000e+00 : f32
    %19 = vector.broadcast %cst_11 : f32 to vector<8x256xf32>
    %20 = vector.broadcast %cst_12 : f32 to vector<8x256xf32>
    %21 = arith.select %18, %19, %20 : vector<8x256xi1>, vector<8x256xf32>
    %22 = arith.truncf %21 : vector<8x256xf32> to vector<8x256xbf16>
    %c0_13 = arith.constant 0 : index
    %c0_14 = arith.constant 0 : index
    %23 = vector.load %arg6[%c0_13, %c0_14] : memref<256x256xbf16, #tpu.memory_space<vmem>>, vector<256x256xbf16>
    %cst_15 = arith.constant dense<0.000000e+00> : vector<8x256xf32>
    %24 = tpu.matmul %22, %23, %cst_15 {dimension_numbers = #tpu.dot_dimension_numbers<[1], [0], [0], [1], [0, 0, 1, 1], [], []>} : vector<8x256xbf16>, vector<256x256xbf16>, vector<8x256xf32> -> vector<8x256xf32>
    %25 = vector.extract_strided_slice %24 {offsets = [0, 0], sizes = [8, 128], strides = [1, 1]} : vector<8x256xf32> to vector<8x128xf32>
    %26 = vector.extract_strided_slice %24 {offsets = [0, 128], sizes = [8, 128], strides = [1, 1]} : vector<8x256xf32> to vector<8x128xf32>
    %27 = tpu.iota {dimensions = array<i32: 1>} : vector<1x128xi32>
    %c8_i32 = arith.constant 8 : i32
    %28 = vector.broadcast %c8_i32 : i32 to vector<1x128xi32>
    %29 = arith.cmpi slt, %27, %28 : vector<1x128xi32>
    %30 = arith.extui %29 : vector<1x128xi1> to vector<1x128xi32>
    %31 = arith.sitofp %30 : vector<1x128xi32> to vector<1x128xf32>
    %c8_i32_16 = arith.constant 8 : i32
    %32 = vector.broadcast %c8_i32_16 : i32 to vector<1x128xi32>
    %33 = arith.cmpi eq, %27, %32 : vector<1x128xi32>
    %34 = arith.extui %33 : vector<1x128xi1> to vector<1x128xi32>
    %35 = arith.sitofp %34 : vector<1x128xi32> to vector<1x128xf32>
    %36 = vector.broadcast %31 : vector<1x128xf32> to vector<8x128xf32>
    %37 = arith.mulf %25, %36 : vector<8x128xf32>
    %38 = vector.broadcast %35 : vector<1x128xf32> to vector<8x128xf32>
    %39 = arith.subf %37, %38 : vector<8x128xf32>
    %40 = arith.mulf %25, %39 : vector<8x128xf32>
    %cst_17 = arith.constant dense<0.000000e+00> : vector<8xf32>
    %41 = vector.multi_reduction <add>, %40, %cst_17 [1] : vector<8x128xf32> to vector<8xf32>
    %42 = vector.shape_cast %41 : vector<8xf32> to vector<8x1xf32>
    %cst_18 = arith.constant 5.000000e-01 : f32
    %43 = vector.broadcast %cst_18 : f32 to vector<8x1xf32>
    %44 = arith.mulf %43, %42 : vector<8x1xf32>
    %c0_19 = arith.constant 0 : index
    %c0_20 = arith.constant 0 : index
    %45 = vector.load %arg7[%c0_19, %c0_20] : memref<1x128xf32, #tpu.memory_space<vmem>>, vector<1x128xf32>
    %46 = vector.broadcast %45 : vector<1x128xf32> to vector<8x128xf32>
    %47 = arith.addf %26, %46 : vector<8x128xf32>
    %cst_21 = arith.constant 0.000000e+00 : f32
    %48 = vector.broadcast %cst_21 : f32 to vector<8x128xf32>
    %49 = arith.maximumf %47, %48 : vector<8x128xf32>
    %50 = arith.truncf %49 : vector<8x128xf32> to vector<8x128xbf16>
    %c0_22 = arith.constant 0 : index
    %c0_23 = arith.constant 0 : index
    %51 = vector.load %arg8[%c0_22, %c0_23] : memref<128x4xbf16, #tpu.memory_space<vmem>>, vector<128x4xbf16>
    %cst_24 = arith.constant dense<0.000000e+00> : vector<8x4xf32>
    %52 = tpu.matmul %50, %51, %cst_24 {dimension_numbers = #tpu.dot_dimension_numbers<[1], [0], [0], [1], [0, 0, 1, 1], [], []>} : vector<8x128xbf16>, vector<128x4xbf16>, vector<8x4xf32> -> vector<8x4xf32>
    %c0_25 = arith.constant 0 : index
    %c0_26 = arith.constant 0 : index
    %53 = vector.load %arg9[%c0_25, %c0_26] : memref<1x4xf32, #tpu.memory_space<vmem>>, vector<1x4xf32>
    %54 = vector.broadcast %53 : vector<1x4xf32> to vector<8x4xf32>
    %55 = arith.addf %52, %54 : vector<8x4xf32>
    %56 = arith.addf %5, %44 : vector<8x1xf32>
    %57 = vector.broadcast %56 : vector<8x1xf32> to vector<8x4xf32>
    %58 = arith.addf %57, %55 : vector<8x4xf32>
    %59 = arith.negf %58 : vector<8x4xf32>
    %60 = math.exp %59 : vector<8x4xf32>
    %cst_27 = arith.constant 1.000000e+00 : f32
    %61 = vector.broadcast %cst_27 : f32 to vector<8x4xf32>
    %62 = arith.addf %61, %60 : vector<8x4xf32>
    %63 = arith.divf %61, %62 : vector<8x4xf32>
    %c0_28 = arith.constant 0 : index
    %c0_29 = arith.constant 0 : index
    %64 = vector.load %arg10[%c0_28, %c0_29] : memref<8x4xf32, #tpu.memory_space<vmem>>, vector<8x4xf32>
    tpu.vector_store %arg10[%c0_28, %c0_29], %63 {strides = array<i32>} : memref<8x4xf32, #tpu.memory_space<vmem>>, vector<8x4xf32>,
    return
  }
  func.func @transform_0(%arg0: i32) -> i32 {
    %c0_i32 = arith.constant 0 : i32
    %c0_i32_0 = arith.constant 0 : i32
    return %c0_i32 : i32
  }
  func.func @transform_1(%arg0: i32) -> (i32, i32) {
    %c0_i32 = arith.constant 0 : i32
    %c0_i32_0 = arith.constant 0 : i32
    return %arg0, %c0_i32 : i32, i32
  }
  func.func @transform_2(%arg0: i32) -> (i32, i32) {
    %c0_i32 = arith.constant 0 : i32
    %c0_i32_0 = arith.constant 0 : i32
    %c0_i32_1 = arith.constant 0 : i32
    return %c0_i32, %c0_i32_0 : i32, i32
  }
  func.func @transform_3(%arg0: i32) -> (i32, i32) {
    %c0_i32 = arith.constant 0 : i32
    %c0_i32_0 = arith.constant 0 : i32
    %c0_i32_1 = arith.constant 0 : i32
    return %c0_i32, %c0_i32_0 : i32, i32
  }
  func.func @transform_4(%arg0: i32) -> (i32, i32) {
    %c0_i32 = arith.constant 0 : i32
    %c0_i32_0 = arith.constant 0 : i32
    %c0_i32_1 = arith.constant 0 : i32
    return %c0_i32, %c0_i32_0 : i32, i32
  }
  func.func @transform_5(%arg0: i32) -> (i32, i32) {
    %c0_i32 = arith.constant 0 : i32
    %c0_i32_0 = arith.constant 0 : i32
    %c0_i32_1 = arith.constant 0 : i32
    return %c0_i32, %c0_i32_0 : i32, i32
  }
  func.func @transform_6(%arg0: i32) -> (i32, i32) {
    %c0_i32 = arith.constant 0 : i32
    %c0_i32_0 = arith.constant 0 : i32
    %c0_i32_1 = arith.constant 0 : i32
    return %c0_i32, %c0_i32_0 : i32, i32
  }
  func.func @transform_7(%arg0: i32) -> (i32, i32) {
    %c0_i32 = arith.constant 0 : i32
    %c0_i32_0 = arith.constant 0 : i32
    %c0_i32_1 = arith.constant 0 : i32
    return %c0_i32, %c0_i32_0 : i32, i32
  }
  func.func @transform_8(%arg0: i32) -> (i32, i32) {
    %c0_i32 = arith.constant 0 : i32
    %c0_i32_0 = arith.constant 0 : i32
    %c0_i32_1 = arith.constant 0 : i32
    return %c0_i32, %c0_i32_0 : i32, i32
  }
  func.func @transform_9(%arg0: i32) -> (i32, i32) {
    %c0_i32 = arith.constant 0 : i32
    %c0_i32_0 = arith.constant 0 : i32
    return %arg0, %c0_i32 : i32, i32
  }
}

</mosaic_0001>

<llo_original>
// kernel: tpu_custom_call.1
$region0: #{tpu_custom_call.1}
  #allocation0 [shape = 'u32[]', space=smem, size = 0x4, offset = 0x4, fixed_abs, tag = 'smem constant byte address 0x4 - core index']
  #allocation1 [shape = 'u32[144,128]{1,0:T(1,128)}', space=vmem, size = 0x12000, scoped, tag = 'internal scratch']
  #allocation2 [shape = 'f32[1]{0:T(128)S(6)}', space=smem, size = 0x200, scoped, tag = 'scoped memory for tpu_custom_call.1']
  %s0 = inlined_call_operand.<no memory space> [shape: f32[1], index: 0, kind: input, shape index: {}]
  %s1 = inlined_call_operand.vmem [shape: f32[8,16], index: 1, kind: input, shape index: {}]
  %s2 = inlined_call_operand.vmem [shape: f32[1,16], index: 2, kind: input, shape index: {}]
  %s3 = inlined_call_operand.vmem [shape: f32[16,256], index: 3, kind: input, shape index: {}]
  %s4 = inlined_call_operand.vmem [shape: f32[1,256], index: 4, kind: input, shape index: {}]
  %s5 = inlined_call_operand.hbm [shape: bf16[256,256], index: 5, kind: input, shape index: {}]
  %s6 = inlined_call_operand.vmem [shape: f32[1,128], index: 6, kind: input, shape index: {}]
  %s7 = inlined_call_operand.vmem [shape: bf16[128,4], index: 7, kind: input, shape index: {}]
  %s8 = inlined_call_operand.vmem [shape: f32[1,4], index: 8, kind: input, shape index: {}]
  %s9 = inlined_call_operand.vmem [shape: f32[8,4], index: 9, kind: output, shape index: {}]
  %s10 = sld [smem:[#allocation0]]
  $region50: #{tpu_custom_call.1} parent=0
    _
  %s12 = ssub.s32 1, %s10
  %s13 = scalar_select 0, %s12, %s10
  %14 = sst [smem:[#allocation2]] %s0
  $region1: #{tpu_custom_call.1} parent=0
    #allocation3 [shape = 'u8[131072]{0}', space=vmem, size = 0x20000, scoped, tag = 'input window, operand 5, single buffered']
    #allocation4 [shape = 's32[1]{0}', space=sflag, size = 0x4, scoped, tag = 'scoped memory for tpu_custom_call.1']
    %15 = vsyncpa [#allocation4], 0
    // Predicated region
    $region2: #{tpu_custom_call.1} parent=1 // pred_check
      _
    $region3: #{tpu_custom_call.1} parent=1 // pred_check_branch
      %17 = sbr.rel (0) target = $region5
    $region4: #{tpu_custom_call.1} parent=1 // pred_region
      _
    $region5: #{tpu_custom_call.1} parent=1 // pred_fallthru
      _
    // Predicated region
    $region6: #{tpu_custom_call.1} parent=1 // pred_check
      _
    $region7: #{tpu_custom_call.1} parent=1 // pred_check_branch
      %19 = sbr.rel (0) target = $region9
    $region8: #{tpu_custom_call.1} parent=1 // pred_region
      _
    $region9: #{tpu_custom_call.1} parent=1 // pred_fallthru
      _
    // Predicated region
    $region10: #{tpu_custom_call.1} parent=1 // pred_check
      _
    $region11: #{tpu_custom_call.1} parent=1 // pred_check_branch
      %21 = sbr.rel (0) target = $region13
    $region12: #{tpu_custom_call.1} parent=1 // pred_region
      _
    $region13: #{tpu_custom_call.1} parent=1 // pred_fallthru
      _
    // Predicated region
    $region14: #{tpu_custom_call.1} parent=1 // pred_check
      _
    $region15: #{tpu_custom_call.1} parent=1 // pred_check_branch
      %23 = sbr.rel (0) target = $region17
    $region16: #{tpu_custom_call.1} parent=1 // pred_region
      _
    $region17: #{tpu_custom_call.1} parent=1 // pred_fallthru
      _
    // Predicated region
    $region18: #{tpu_custom_call.1} parent=1 // pred_check
      _
    $region19: #{tpu_custom_call.1} parent=1 // pred_check_branch
      %25 = sbr.rel (0) target = $region21
    $region20: #{tpu_custom_call.1} parent=1 // pred_region
      _
    $region21: #{tpu_custom_call.1} parent=1 // pred_fallthru
      _
    // Predicated region
    $region22: #{tpu_custom_call.1} parent=1 // pred_check
      _
    $region23: #{tpu_custom_call.1} parent=1 // pred_check_branch
      %27 = sbr.rel (0) target = $region25
    $region24: #{tpu_custom_call.1} parent=1 // pred_region
      %s29 = ssub.s32 4096, 4096
      %30 = vsyncadd [#allocation4], %s29
      %s31 = sshll.u32 [#allocation3], 4
      %s32 = int_to_ptr.vmem [resolvable:$true] %s31
      %37 = dma.hbm_to_vmem [thread:$0]  %s5, 4096, %s32, [#allocation4], 128, 128, 8
    $region25: #{tpu_custom_call.1} parent=1 // pred_fallthru
      _
    // Predicated region
    $region26: #{tpu_custom_call.1} parent=1 // pred_check
      _
    $region27: #{tpu_custom_call.1} parent=1 // pred_check_branch
      %39 = sbr.rel (0) target = $region29
    $region28: #{tpu_custom_call.1} parent=1 // pred_region
      _
    $region29: #{tpu_custom_call.1} parent=1 // pred_fallthru
      _
    // Predicated region
    $region30: #{tpu_custom_call.1} parent=1 // pred_check
      _
    $region31: #{tpu_custom_call.1} parent=1 // pred_check_branch
      %41 = sbr.rel (0) target = $region33
    $region32: #{tpu_custom_call.1} parent=1 // pred_region
      _
    $region33: #{tpu_custom_call.1} parent=1 // pred_fallthru
      _
    // Predicated region
    $region34: #{tpu_custom_call.1} parent=1 // pred_check
      _
    $region35: #{tpu_custom_call.1} parent=1 // pred_check_branch
      %43 = sbr.rel (0) target = $region37
    $region36: #{tpu_custom_call.1} parent=1 // pred_region
      _
    $region37: #{tpu_custom_call.1} parent=1 // pred_fallthru
      _
    // Predicated region
    $region38: #{tpu_custom_call.1} parent=1 // pred_check
      _
    $region39: #{tpu_custom_call.1} parent=1 // pred_check_branch
      %45 = sbr.rel (0) target = $region41
    $region40: #{tpu_custom_call.1} parent=1 // pred_region
      %46 = dma.done [#allocation4], 4096
    $region41: #{tpu_custom_call.1} parent=1 // pred_fallthru
      _
    %v48 = vld [vmem:[%s1] sm:$0xff]
    %v49 = vld [vmem:[%s2] sm:$0x1]
    %v51 = vlaneseq
    %v52 = vshrl.u32 %v51, 7
    %v53 = vsub.s32 0, %v52
    %v54 = vrot.slane %v49, %v53
    %v56 = vmul.f32 %v48, %v54
    %vm57 = vcmask 130048
    %v58 = vsel %vm57, %v56, 0.0
    %59 = vadd.xlane.f32.xlu0 %v58
    %v60 = vpop.xlane.xlu0 %59
    %s61 = sld [smem:[#allocation2]]
    %v62 = vld [vmem:[%s3] sm:$0xff]
    %v63 = vld [vmem:[%s3 + $0x8] sm:$0xff]
    %v64 = vld [vmem:[%s3 + $0x10] sm:$0xff]
    %v65 = vld [vmem:[%s3 + $0x18] sm:$0xff]
    %v66 = vstv %s61
    %v68 = vsel %vm57, %v48, 0
    %70 = vmatprep.subr.mxu0 0.0
    %71 = vmatpush1.msra.mxu0 0.0
    %72 = vmatprep.subr.mxu0 0.0
    %73 = vmatpush1.msra.mxu0 0.0
    %74 = vmatprep.subr.mxu0 0.0
    %75 = vmatpush1.msra.mxu0 0.0
    %76 = vmatprep.subr.mxu0 0.0
    %77 = vmatpush1.msra.mxu0 0.0
    %78 = vmatprep.subr.mxu0 0.0
    %79 = vmatpush1.msra.mxu0 0.0
    %80 = vmatprep.subr.mxu0 0.0
    %81 = vmatpush1.msra.mxu0 0.0
    %82 = vmatprep.subr.mxu0 0.0
    %83 = vmatpush1.msra.mxu0 0.0
    %84 = vmatprep.subr.mxu0 0.0
    %85 = vmatpush1.msra.mxu0 0.0
    %86 = vmatprep.subr.mxu0 0.0
    %87 = vmatpush1.msra.mxu0 0.0
    %88 = vmatprep.subr.mxu0 0.0
    %89 = vmatpush1.msra.mxu0 0.0
    %90 = vmatprep.subr.mxu0 0.0
    %91 = vmatpush1.msra.mxu0 0.0
    %92 = vmatprep.subr.mxu0 0.0
    %93 = vmatpush1.msra.mxu0 0.0
    %94 = vmatprep.subr.mxu0 0.0
    %95 = vmatpush1.msra.mxu0 0.0
    %96 = vmatprep.subr.mxu0 0.0
    %97 = vmatpush1.msra.mxu0 0.0
    %98 = vmatprep.subr.mxu0 %v65
    %99 = vmatpush1.msra.mxu0 %v64
    %100 = vmatprep.subr.mxu0 %v63
    %101 = vmatpush1.msra.mxu0 %v62
    %102 = vmatprep.subr.mxu0 0.0
    %103 = vmatpush2.msra.mxu0 0.0
    %104 = vmatprep.subr.mxu0 0.0
    %105 = vmatpush2.msra.mxu0 0.0
    %106 = vmatprep.subr.mxu0 0.0
    %107 = vmatpush2.msra.mxu0 0.0
    %108 = vmatprep.subr.mxu0 0.0
    %109 = vmatpush2.msra.mxu0 0.0
    %110 = vmatprep.subr.mxu0 0.0
    %111 = vmatpush2.msra.mxu0 0.0
    %112 = vmatprep.subr.mxu0 0.0
    %113 = vmatpush2.msra.mxu0 0.0
    %114 = vmatprep.subr.mxu0 0.0
    %115 = vmatpush2.msra.mxu0 0.0
    %116 = vmatprep.subr.mxu0 0.0
    %117 = vmatpush2.msra.mxu0 0.0
    %118 = vmatprep.subr.mxu0 0.0
    %119 = vmatpush2.msra.mxu0 0.0
    %120 = vmatprep.subr.mxu0 0.0
    %121 = vmatpush2.msra.mxu0 0.0
    %122 = vmatprep.subr.mxu0 0.0
    %123 = vmatpush2.msra.mxu0 0.0
    %124 = vmatprep.subr.mxu0 0.0
    %125 = vmatpush2.msra.mxu0 0.0
    %126 = vmatprep.subr.mxu0 0.0
    %127 = vmatpush2.msra.mxu0 0.0
    %128 = vmatprep.subr.mxu0 0.0
    %129 = vmatpush2.msra.mxu0 0.0
    %130 = vmatprep.subr.mxu0 0.0
    %131 = vmatpush2.msra.mxu0 0.0
    %132 = vmatprep.subr.mxu0 0.0
    %133 = vmatpush2.msra.mxu0 0.0
    %134 = vmatprep.mubr.f32.mxu0 0.0
    %135 = vmatmul.mubr.f32.gmra.mxu0 %v68
    %v136 = vpop.f32.mrf.mxu0
    %v137 = vadd.f32 %v66, %v136
    %v138 = vpop.f32.mrf.mxu0
    %v139 = vadd.f32 %v66, %v138
    %140 = vdwg.mxu0
    %v141 = vfloor.f32 %v137
    %v142 = vfloor.f32 %v139
    %v143 = vmax.f32 %v141, 0.0
    %v144 = vmax.f32 %v142, 0.0
    %v145 = vmin.f32 %v143, 15.0
    %v146 = vmin.f32 %v144, 15.0
    %v147 = vld [vmem:[%s4] sm:$0x3]
    %v149 = vlaneseq
    %v150 = vshrl.u32 %v149, 7
    %v151 = vsub.s32 0, %v150
    %v152 = vrot.slane %v147, %v151
    %v153 = vlaneseq
    %v154 = vshrl.u32 %v153, 7
    %v155 = vsub.s32 1, %v154
    %v156 = vrot.slane %v147, %v155
    %vm159 = vcmp.eq.f32.partialorder %v145, %v152
    %vm160 = vcmp.eq.f32.partialorder %v146, %v156
    %v161 = vsel %vm159, 1.0, 0.0
    %v162 = vsel %vm160, 1.0, 0.0
    %v163 = vpack.c.bf16 %v161, %v161
    %v164 = vpack.c.bf16 %v162, %v162
    %v165 = vld [vmem:[#allocation3] sm:$0xff]
    %v166 = vld [vmem:[#allocation3 + $0x8] sm:$0xff]
    %v167 = vld [vmem:[#allocation3 + $0x10] sm:$0xff]
    %v168 = vld [vmem:[#allocation3 + $0x18] sm:$0xff]
    %v169 = vld [vmem:[#allocation3 + $0x20] sm:$0xff]
    %v170 = vld [vmem:[#allocation3 + $0x28] sm:$0xff]
    %v171 = vld [vmem:[#allocation3 + $0x30] sm:$0xff]
    %v172 = vld [vmem:[#allocation3 + $0x38] sm:$0xff]
    %v173 = vld [vmem:[#allocation3 + $0x40] sm:$0xff]
    %v174 = vld [vmem:[#allocation3 + $0x48] sm:$0xff]
    %v175 = vld [vmem:[#allocation3 + $0x50] sm:$0xff]
    %v176 = vld [vmem:[#allocation3 + $0x58] sm:$0xff]
    %v177 = vld [vmem:[#allocation3 + $0x60] sm:$0xff]
    %v178 = vld [vmem:[#allocation3 + $0x68] sm:$0xff]
    %v179 = vld [vmem:[#allocation3 + $0x70] sm:$0xff]
    %v180 = vld [vmem:[#allocation3 + $0x78] sm:$0xff]
    %v181 = vld [vmem:[#allocation3 + $0x80] sm:$0xff]
    %v182 = vld [vmem:[#allocation3 + $0x88] sm:$0xff]
    %v183 = vld [vmem:[#allocation3 + $0x90] sm:$0xff]
    %v184 = vld [vmem:[#allocation3 + $0x98] sm:$0xff]
    %v185 = vld [vmem:[#allocation3 + $0xa0] sm:$0xff]
    %v186 = vld [vmem:[#allocation3 + $0xa8] sm:$0xff]
    %v187 = vld [vmem:[#allocation3 + $0xb0] sm:$0xff]
    %v188 = vld [vmem:[#allocation3 + $0xb8] sm:$0xff]
    %v189 = vld [vmem:[#allocation3 + $0xc0] sm:$0xff]
    %v190 = vld [vmem:[#allocation3 + $0xc8] sm:$0xff]
    %v191 = vld [vmem:[#allocation3 + $0xd0] sm:$0xff]
    %v192 = vld [vmem:[#allocation3 + $0xd8] sm:$0xff]
    %v193 = vld [vmem:[#allocation3 + $0xe0] sm:$0xff]
    %v194 = vld [vmem:[#allocation3 + $0xe8] sm:$0xff]
    %v195 = vld [vmem:[#allocation3 + $0xf0] sm:$0xff]
    %v196 = vld [vmem:[#allocation3 + $0xf8] sm:$0xff]
    %v229 = vunpack.c.l.b16 %v165
    %v230 = vunpack.c.h.b16 %v165
    %v231 = vunpack.c.l.b16 %v166
    %v232 = vunpack.c.h.b16 %v166
    %v233 = vunpack.c.l.b16 %v167
    %v234 = vunpack.c.h.b16 %v167
    %v235 = vunpack.c.l.b16 %v168
    %v236 = vunpack.c.h.b16 %v168
    %v237 = vunpack.c.l.b16 %v169
    %v238 = vunpack.c.h.b16 %v169
    %v239 = vunpack.c.l.b16 %v170
    %v240 = vunpack.c.h.b16 %v170
    %v241 = vunpack.c.l.b16 %v171
    %v242 = vunpack.c.h.b16 %v171
    %v243 = vunpack.c.l.b16 %v172
    %v244 = vunpack.c.h.b16 %v172
    %v245 = vunpack.c.l.b16 %v173
    %v246 = vunpack.c.h.b16 %v173
    %v247 = vunpack.c.l.b16 %v174
    %v248 = vunpack.c.h.b16 %v174
    %v249 = vunpack.c.l.b16 %v175
    %v250 = vunpack.c.h.b16 %v175
    %v251 = vunpack.c.l.b16 %v176
    %v252 = vunpack.c.h.b16 %v176
    %v253 = vunpack.c.l.b16 %v177
    %v254 = vunpack.c.h.b16 %v177
    %v255 = vunpack.c.l.b16 %v178
    %v256 = vunpack.c.h.b16 %v178
    %v257 = vunpack.c.l.b16 %v179
    %v258 = vunpack.c.h.b16 %v179
    %v259 = vunpack.c.l.b16 %v180
    %v260 = vunpack.c.h.b16 %v180
    %v261 = vunpack.c.l.b16 %v181
    %v262 = vunpack.c.h.b16 %v181
    %v263 = vunpack.c.l.b16 %v182
    %v264 = vunpack.c.h.b16 %v182
    %v265 = vunpack.c.l.b16 %v183
    %v266 = vunpack.c.h.b16 %v183
    %v267 = vunpack.c.l.b16 %v184
    %v268 = vunpack.c.h.b16 %v184
    %v269 = vunpack.c.l.b16 %v185
    %v270 = vunpack.c.h.b16 %v185
    %v271 = vunpack.c.l.b16 %v186
    %v272 = vunpack.c.h.b16 %v186
    %v273 = vunpack.c.l.b16 %v187
    %v274 = vunpack.c.h.b16 %v187
    %v275 = vunpack.c.l.b16 %v188
    %v276 = vunpack.c.h.b16 %v188
    %v277 = vunpack.c.l.b16 %v189
    %v278 = vunpack.c.h.b16 %v189
    %v279 = vunpack.c.l.b16 %v190
    %v280 = vunpack.c.h.b16 %v190
    %v281 = vunpack.c.l.b16 %v191
    %v282 = vunpack.c.h.b16 %v191
    %v283 = vunpack.c.l.b16 %v192
    %v284 = vunpack.c.h.b16 %v192
    %v285 = vunpack.c.l.b16 %v193
    %v286 = vunpack.c.h.b16 %v193
    %v287 = vunpack.c.l.b16 %v194
    %v288 = vunpack.c.h.b16 %v194
    %v289 = vunpack.c.l.b16 %v195
    %v290 = vunpack.c.h.b16 %v195
    %v291 = vunpack.c.l.b16 %v196
    %v292 = vunpack.c.h.b16 %v196
    %v293 = vpack.c.b16 %v231, %v229
    %v294 = vpack.c.b16 %v232, %v230
    %v295 = vpack.c.b16 %v235, %v233
    %v296 = vpack.c.b16 %v236, %v234
    %v297 = vpack.c.b16 %v239, %v237
    %v298 = vpack.c.b16 %v240, %v238
    %v299 = vpack.c.b16 %v243, %v241
    %v300 = vpack.c.b16 %v244, %v242
    %v301 = vpack.c.b16 %v247, %v245
    %v302 = vpack.c.b16 %v248, %v246
    %v303 = vpack.c.b16 %v251, %v249
    %v304 = vpack.c.b16 %v252, %v250
    %v305 = vpack.c.b16 %v255, %v253
    %v306 = vpack.c.b16 %v256, %v254
    %v307 = vpack.c.b16 %v259, %v257
    %v308 = vpack.c.b16 %v260, %v258
    %v309 = vpack.c.b16 %v263, %v261
    %v310 = vpack.c.b16 %v264, %v262
    %v311 = vpack.c.b16 %v267, %v265
    %v312 = vpack.c.b16 %v268, %v266
    %v313 = vpack.c.b16 %v271, %v269
    %v314 = vpack.c.b16 %v272, %v270
    %v315 = vpack.c.b16 %v275, %v273
    %v316 = vpack.c.b16 %v276, %v274
    %v317 = vpack.c.b16 %v279, %v277
    %v318 = vpack.c.b16 %v280, %v278
    %v319 = vpack.c.b16 %v283, %v281
    %v320 = vpack.c.b16 %v284, %v282
    %v321 = vpack.c.b16 %v287, %v285
    %v322 = vpack.c.b16 %v288, %v286
    %v323 = vpack.c.b16 %v291, %v289
    %v324 = vpack.c.b16 %v292, %v290
    %357 = vmatprep.subr.bf16.mxu0 %v308
    %358 = vmatpush1.bf16.msra.mxu0 %v307
    %359 = vmatprep.subr.bf16.mxu0 %v306
    %360 = vmatpush1.bf16.msra.mxu0 %v305
    %361 = vmatprep.subr.bf16.mxu0 %v304
    %362 = vmatpush1.bf16.msra.mxu0 %v303
    %363 = vmatprep.subr.bf16.mxu0 %v302
    %364 = vmatpush1.bf16.msra.mxu0 %v301
    %365 = vmatprep.subr.bf16.mxu0 %v300
    %366 = vmatpush1.bf16.msra.mxu0 %v299
    %367 = vmatprep.subr.bf16.mxu0 %v298
    %368 = vmatpush1.bf16.msra.mxu0 %v297
    %369 = vmatprep.subr.bf16.mxu0 %v296
    %370 = vmatpush1.bf16.msra.mxu0 %v295
    %371 = vmatprep.subr.bf16.mxu0 %v294
    %372 = vmatpush1.bf16.msra.mxu0 %v293
    %373 = vmatprep.subr.bf16.mxu0 %v324
    %374 = vmatpush2.bf16.msra.mxu0 %v323
    %375 = vmatprep.subr.bf16.mxu0 %v322
    %376 = vmatpush2.bf16.msra.mxu0 %v321
    %377 = vmatprep.subr.bf16.mxu0 %v320
    %378 = vmatpush2.bf16.msra.mxu0 %v319
    %379 = vmatprep.subr.bf16.mxu0 %v318
    %380 = vmatpush2.bf16.msra.mxu0 %v317
    %381 = vmatprep.subr.bf16.mxu0 %v316
    %382 = vmatpush2.bf16.msra.mxu0 %v315
    %383 = vmatprep.subr.bf16.mxu0 %v314
    %384 = vmatpush2.bf16.msra.mxu0 %v313
    %385 = vmatprep.subr.bf16.mxu0 %v312
    %386 = vmatpush2.bf16.msra.mxu0 %v311
    %387 = vmatprep.subr.bf16.mxu0 %v310
    %388 = vmatpush2.bf16.msra.mxu0 %v309
    %389 = vmatprep.mubr.bf16.mxu0 %v164
    %390 = vmatmul.mubr.bf16.gmra.mxu0 %v163
    %v391 = vpop.f32.mrf.mxu0
    %v392 = vadd.f32 0.0, %v391
    %v393 = vpop.f32.mrf.mxu0
    %v394 = vadd.f32 0.0, %v393
    %v395 = vpop.f32.mrf.mxu0
    %v396 = vpop.f32.mrf.mxu0
    %397 = vdwg.mxu0
    %v398 = vlaneseq
    %v399 = vand.u32 %v398, 127
    %vm400 = vcmp.lt.s32.totalorder %v399, 8
    %v401 = vsel %vm400, 1, 0
    %v402 = vcvt.s32.f32 %v401
    %vm403 = vcmp.eq.s32.totalorder %v399, 8
    %v404 = vsel %vm403, 1, 0
    %v405 = vcvt.s32.f32 %v404
    %v406 = vmul.f32 %v392, %v402
    %v407 = vsub.f32 %v406, %v405
    %v408 = vmul.f32 %v392, %v407
    %409 = vadd.xlane.f32.xlu0 %v408
    %v410 = vpop.xlane.xlu0 %409
    %v411 = vmul.f32 %v410, 0.5
    %v412 = vld [vmem:[%s6] sm:$0x1]
    %v414 = vlaneseq
    %v415 = vshrl.u32 %v414, 7
    %v416 = vsub.s32 0, %v415
    %v417 = vrot.slane %v412, %v416
    %v419 = vadd.f32 %v394, %v417
    %v420 = vmax.f32 %v419, 0.0
    %v421 = vpack.c.bf16 %v420, %v420
    %v422 = vld [vmem:[%s7] sm:$0xf]
    %v423 = vld [vmem:[%s7 + $0x4] sm:$0xf]
    %v424 = vld [vmem:[%s7 + $0x8] sm:$0xf]
    %v425 = vld [vmem:[%s7 + $0xc] sm:$0xf]
    %v426 = vld [vmem:[%s7 + $0x10] sm:$0xf]
    %v427 = vld [vmem:[%s7 + $0x14] sm:$0xf]
    %v428 = vld [vmem:[%s7 + $0x18] sm:$0xf]
    %v429 = vld [vmem:[%s7 + $0x1c] sm:$0xf]
    %v430 = vld [vmem:[%s7 + $0x20] sm:$0xf]
    %v431 = vld [vmem:[%s7 + $0x24] sm:$0xf]
    %v432 = vld [vmem:[%s7 + $0x28] sm:$0xf]
    %v433 = vld [vmem:[%s7 + $0x2c] sm:$0xf]
    %v434 = vld [vmem:[%s7 + $0x30] sm:$0xf]
    %v435 = vld [vmem:[%s7 + $0x34] sm:$0xf]
    %v436 = vld [vmem:[%s7 + $0x38] sm:$0xf]
    %v437 = vld [vmem:[%s7 + $0x3c] sm:$0xf]
    %v438 = vld [vmem:[%s8] sm:$0x1]
    %v440 = vlaneseq
    %v441 = vshrl.u32 %v440, 7
    %v442 = vsub.s32 0, %v441
    %v443 = vrot.slane %v438, %v442
    %v461 = vunpack.c.l.b16 %v422
    %v462 = vunpack.c.l.b16 %v423
    %v463 = vunpack.c.l.b16 %v424
    %v464 = vunpack.c.l.b16 %v425
    %v465 = vunpack.c.l.b16 %v426
    %v466 = vunpack.c.l.b16 %v427
    %v467 = vunpack.c.l.b16 %v428
    %v468 = vunpack.c.l.b16 %v429
    %v469 = vunpack.c.l.b16 %v430
    %v470 = vunpack.c.l.b16 %v431
    %v471 = vunpack.c.l.b16 %v432
    %v472 = vunpack.c.l.b16 %v433
    %v473 = vunpack.c.l.b16 %v434
    %v474 = vunpack.c.l.b16 %v435
    %v475 = vunpack.c.l.b16 %v436
    %v476 = vunpack.c.l.b16 %v437
    %v477 = vpack.c.b16 %v462, %v461
    %v478 = vpack.c.b16 %v464, %v463
    %v479 = vpack.c.b16 %v466, %v465
    %v480 = vpack.c.b16 %v468, %v467
    %v481 = vpack.c.b16 %v470, %v469
    %v482 = vpack.c.b16 %v472, %v471
    %v483 = vpack.c.b16 %v474, %v473
    %v484 = vpack.c.b16 %v476, %v475
    %493 = vmatprep.subr.bf16.mxu0 0
    %494 = vmatpush1.bf16.msra.mxu0 %v484
    %495 = vmatprep.subr.bf16.mxu0 0
    %496 = vmatpush1.bf16.msra.mxu0 %v483
    %497 = vmatprep.subr.bf16.mxu0 0
    %498 = vmatpush1.bf16.msra.mxu0 %v482
    %499 = vmatprep.subr.bf16.mxu0 0
    %500 = vmatpush1.bf16.msra.mxu0 %v481
    %501 = vmatprep.subr.bf16.mxu0 0
    %502 = vmatpush1.bf16.msra.mxu0 %v480
    %503 = vmatprep.subr.bf16.mxu0 0
    %504 = vmatpush1.bf16.msra.mxu0 %v479
    %505 = vmatprep.subr.bf16.mxu0 0
    %506 = vmatpush1.bf16.msra.mxu0 %v478
    %507 = vmatprep.subr.bf16.mxu0 0
    %508 = vmatpush1.bf16.msra.mxu0 %v477
    %509 = vmatprep.subr.bf16.mxu0 0
    %510 = vmatpush2.bf16.msra.mxu0 0
    %511 = vmatprep.subr.bf16.mxu0 0
    %512 = vmatpush2.bf16.msra.mxu0 0
    %513 = vmatprep.subr.bf16.mxu0 0
    %514 = vmatpush2.bf16.msra.mxu0 0
    %515 = vmatprep.subr.bf16.mxu0 0
    %516 = vmatpush2.bf16.msra.mxu0 0
    %517 = vmatprep.subr.bf16.mxu0 0
    %518 = vmatpush2.bf16.msra.mxu0 0
    %519 = vmatprep.subr.bf16.mxu0 0
    %520 = vmatpush2.bf16.msra.mxu0 0
    %521 = vmatprep.subr.bf16.mxu0 0
    %522 = vmatpush2.bf16.msra.mxu0 0
    %523 = vmatprep.subr.bf16.mxu0 0
    %524 = vmatpush2.bf16.msra.mxu0 0
    %525 = vmatprep.mubr.bf16.mxu0 0
    %526 = vmatmul.mubr.bf16.gmra.mxu0 %v421
    %v527 = vpop.f32.mrf.mxu0
    %v528 = vadd.f32 %v443, %v527
    %v529 = vpop.f32.mrf.mxu0
    %v530 = vpop.f32.mrf.mxu0
    %v531 = vpop.f32.mrf.mxu0
    %532 = vdwg.mxu0
    %v533 = vadd.f32 %v60, %v411
    %v534 = vadd.f32 %v533, %v528
    %v535 = vxor.u32 %v534, 2147483648
    %v536 = vmul.f32 %v535, 1.442695
    %v537 = vpow.pop %v536
    %v538 = vadd.f32 %v537, 1.0
    %v539 = vrcp.pop %v538
    %v540 = vmul.f32 1.0, %v539
    %vm541 = vcmask 31744
    %542 = vst.msk [vmem:[%s9] sm:$0xff] %vm541, %v540
    // Predicated region
    $region42: #{tpu_custom_call.1} parent=1 // pred_check
      _
    $region43: #{tpu_custom_call.1} parent=1 // pred_check_branch
      %544 = sbr.rel (0) target = $region45
    $region44: #{tpu_custom_call.1} parent=1 // pred_region
      _
    $region45: #{tpu_custom_call.1} parent=1 // pred_fallthru
      _
    // Predicated region
    $region46: #{tpu_custom_call.1} parent=1 // pred_check
      _
    $region47: #{tpu_custom_call.1} parent=1 // pred_check_branch
      %546 = sbr.rel (0) target = $region49
    $region48: #{tpu_custom_call.1} parent=1 // pred_region
      _
    $region49: #{tpu_custom_call.1} parent=1 // pred_fallthru
      _
    %547 = vsyncpa [#allocation4], 1

</llo_original>
